<compile_context>
chip_gen: v5e
topology: v5e:2x2
jax: 0.10.0
libtpu: 0.0.40
codegen_flags: <defaults>
</compile_context>

<pallas_src>
import jax
import jax.numpy as jnp
from jax.experimental import pallas as pl
from jax.experimental.pallas import tpu as pltpu

_LANES = 128
_MAX_BLOCK_ROWS = 2048  # 2048 x 128 x 4B = 1 MiB per f32 block (sublane-aligned).


def _identity_copy_kernel(x_ref, o_ref):
    # Straight VMEM tile copy: one vld / one (unmasked, lane-dense) vst per vreg.
    o_ref[...] = x_ref[...]


def eq_model_forward(x: jax.Array) -> jax.Array:
    """Pallas implementation of EQModel.forward (identity)."""
    size = x.size
    nbytes = size * x.dtype.itemsize
    cost = pl.CostEstimate(flops=0, transcendentals=0, bytes_accessed=2 * nbytes)

    if size % _LANES == 0 and size > 0:
        # Lane-dense path: view the buffer as (rows, 128).
        rows = size // _LANES
        x2 = x.reshape(rows, _LANES)
        block_rows = rows if rows <= _MAX_BLOCK_ROWS else _MAX_BLOCK_ROWS
        grid = (pl.cdiv(rows, block_rows),)
        y2 = pl.pallas_call(
            _identity_copy_kernel,
            out_shape=jax.ShapeDtypeStruct((rows, _LANES), x.dtype),
            grid=grid,
            in_specs=[pl.BlockSpec((block_rows, _LANES), lambda i: (i, 0))],
            out_specs=pl.BlockSpec((block_rows, _LANES), lambda i: (i, 0)),
            compiler_params=pltpu.CompilerParams(
                dimension_semantics=("parallel",)),
            cost_estimate=cost,
        )(x2)
        return y2.reshape(x.shape)

    # Fallback (size not a multiple of 128): single whole-array block, which is
    # always a legal block shape regardless of (8, 128) alignment.
    x2 = x if x.ndim >= 2 else x.reshape(1, max(size, 1))
    ndim = x2.ndim
    y2 = pl.pallas_call(
        _identity_copy_kernel,
        out_shape=jax.ShapeDtypeStruct(x2.shape, x2.dtype),
        grid=(1,),
        in_specs=[pl.BlockSpec(x2.shape, lambda i: (0,) * ndim)],
        out_specs=pl.BlockSpec(x2.shape, lambda i: (0,) * ndim),
        compiler_params=pltpu.CompilerParams(
            dimension_semantics=("arbitrary",)),
        cost_estimate=cost,
    )(x2)
    return y2.reshape(x.shape)


if __name__ == "__main__":
    key = jax.random.PRNGKey(0)
    # Small NCHW input consistent with a conv-style module: batch=2, channels=4,
    # spatial=16x16.
    x = jax.random.normal(key, (2, 4, 16, 16), dtype=jnp.float32)

    fwd = jax.jit(eq_model_forward)
    y = jax.block_until_ready(fwd(x))

    assert y.shape == x.shape
    assert y.dtype == x.dtype
    assert bool(jnp.all(y == x))

    print("KERNEL_OK")
</pallas_src>

<mosaic_0001>
module attributes {stable_mosaic.version = 11 : i64} {
  func.func @_identity_copy_kernel(%arg0: i32, %arg1: memref<16x128xf32, #tpu.memory_space<vmem>>, %arg2: memref<16x128xf32, #tpu.memory_space<vmem>>) attributes {dimension_semantics = [#tpu.dimension_semantics<parallel>], iteration_bounds = array<i64: 1>, scalar_prefetch = 0 : i64, scratch_operands = 0 : i64, tpu.core_type = #tpu.core_type<tc>, window_params = [{transform_indices = @transform_0, window_bounds = array<i64: 16, 128>}, {transform_indices = @transform_1, window_bounds = array<i64: 16, 128>}]} {
    %c0 = arith.constant 0 : index
    %c0_0 = arith.constant 0 : index
    %0 = vector.load %arg1[%c0, %c0_0] : memref<16x128xf32, #tpu.memory_space<vmem>>, vector<16x128xf32>
    %c0_1 = arith.constant 0 : index
    %c0_2 = arith.constant 0 : index
    %1 = vector.load %arg2[%c0_1, %c0_2] : memref<16x128xf32, #tpu.memory_space<vmem>>, vector<16x128xf32>
    tpu.vector_store %arg2[%c0_1, %c0_2], %0 {strides = array<i32>} : memref<16x128xf32, #tpu.memory_space<vmem>>, vector<16x128xf32>,
    return
  }
  func.func @transform_0(%arg0: i32) -> (i32, i32) {
    %c0_i32 = arith.constant 0 : i32
    %c0_i32_0 = arith.constant 0 : i32
    return %arg0, %c0_i32 : i32, i32
  }
  func.func @transform_1(%arg0: i32) -> (i32, i32) {
    %c0_i32 = arith.constant 0 : i32
    %c0_i32_0 = arith.constant 0 : i32
    return %arg0, %c0_i32 : i32, i32
  }
}

</mosaic_0001>

<llo_original>
// kernel: eq_model_forward.1
$region0: #{eq_model_forward.1}
  #allocation0 [shape = 'u32[]', space=smem, size = 0x4, offset = 0x4, fixed_abs, tag = 'smem constant byte address 0x4 - core index']
  #allocation1 [shape = 'u32[72,128]{1,0:T(1,128)}', space=vmem, size = 0x9000, scoped, tag = 'internal scratch']
  %s0 = inlined_call_operand.vmem [shape: f32[16,128], index: 0, kind: input, shape index: {}]
  %s1 = inlined_call_operand.vmem [shape: f32[16,128], index: 1, kind: output, shape index: {}]
  %s2 = sld [smem:[#allocation0]]
  $region14: #{eq_model_forward.1} parent=0
    _
  %s4 = ssub.s32 1, %s2
  %s5 = scalar_select 0, %s4, %s2
  // Predicated region
  $region2: #{eq_model_forward.1} parent=0 // pred_check
    _
  $region3: #{eq_model_forward.1} parent=0 // pred_check_branch
    %7 = sbr.rel (0) target = $region5
  $region4: #{eq_model_forward.1} parent=0 // pred_region
    _
  $region5: #{eq_model_forward.1} parent=0 // pred_fallthru
    _
  %v8 = vld [vmem:[%s0] sm:$0xff]
  %v9 = vld [vmem:[%s0 + $0x8] sm:$0xff]
  %10 = vst [vmem:[%s1] sm:$0xff] %v8
  %11 = vst [vmem:[%s1 + $0x8] sm:$0xff] %v9
  // Predicated region
  $region6: #{eq_model_forward.1} parent=0 // pred_check
    _
  $region7: #{eq_model_forward.1} parent=0 // pred_check_branch
    %13 = sbr.rel (0) target = $region9
  $region8: #{eq_model_forward.1} parent=0 // pred_region
    _
  $region9: #{eq_model_forward.1} parent=0 // pred_fallthru
    _
  // Predicated region
  $region10: #{eq_model_forward.1} parent=0 // pred_check
    _
  $region11: #{eq_model_forward.1} parent=0 // pred_check_branch
    %15 = sbr.rel (0) target = $region13
  $region12: #{eq_model_forward.1} parent=0 // pred_region
    _
  $region13: #{eq_model_forward.1} parent=0 // pred_fallthru
    _

</llo_original>
